<compile_context>
chip_gen: v7x
topology: tpu7x:2x2x1
jax: 0.10.0
libtpu: 0.0.40
codegen_flags: <defaults>
</compile_context>

<pallas_src>
import jax
import jax.numpy as jnp
from jax import lax
from jax.experimental import pallas as pl
from jax.experimental.pallas import tpu as pltpu


def sop_head_kernel(x_ref, w_ref, b_ref, o_ref):
    # Dropout: identity in eval mode (no-op on the hot path).
    x = x_ref[...].astype(jnp.bfloat16)            # [B, H]
    w = w_ref[...].astype(jnp.bfloat16)            # [L, H]  (native PyTorch layout)

    # x @ w.T without any data movement: contract H on both operands.
    logits = lax.dot_general(
        x, w,
        dimension_numbers=(((1,), (1,)), ((), ())),
        preferred_element_type=jnp.float32,
    )                                              # [B, L] f32 accumulate

    # Bias add from SMEM scalars (avoids a padded (1, L) VMEM tile + DMA).
    B, L = o_ref.shape
    col = lax.broadcasted_iota(jnp.int32, (B, L), 1)
    bias = jnp.zeros((B, L), jnp.float32)
    for i in range(L):                             # L is tiny (num_labels)
        bias = jnp.where(col == i, b_ref[i], bias)

    o_ref[...] = (logits + bias).astype(o_ref.dtype)


def albert_sop_head(pooled_output, weight, bias):
    """pooled_output: [B, H] f32, weight: [L, H] (PyTorch layout), bias: [L]."""
    B, H = pooled_output.shape
    L = weight.shape[0]

    return pl.pallas_call(
        sop_head_kernel,
        out_shape=jax.ShapeDtypeStruct((B, L), pooled_output.dtype),
        in_specs=[
            pl.BlockSpec(memory_space=pltpu.MemorySpace.VMEM),   # x, whole array
            pl.BlockSpec(memory_space=pltpu.MemorySpace.VMEM),   # W, native [L, H]
            pl.BlockSpec(memory_space=pltpu.MemorySpace.SMEM),   # bias scalars
        ],
        out_specs=pl.BlockSpec(memory_space=pltpu.MemorySpace.VMEM),
    )(pooled_output, weight, bias)


if __name__ == "__main__":
    # Small shapes consistent with the module: batch=8, hidden=128, num_labels=2.
    B, H, L = 8, 128, 2

    key = jax.random.PRNGKey(0)
    kx, kw, kb = jax.random.split(key, 3)

    pooled_output = jax.random.normal(kx, (B, H), dtype=jnp.float32)
    # Deterministic parameter init (synthetic weights, not a checkpoint load).
    weight = jax.random.normal(kw, (L, H), dtype=jnp.float32) * 0.02
    bias = jax.random.normal(kb, (L,), dtype=jnp.float32) * 0.02

    logits = albert_sop_head(pooled_output, weight, bias)
    jax.block_until_ready(logits)

    # Correctness check vs plain-JAX f32 reference (eval-mode dropout = identity).
    # Tolerance loosened because the kernel feeds bf16 into the MXU (f32 accumulate).
    ref = pooled_output @ weight.T + bias
    assert logits.shape == (B, L)
    assert jnp.allclose(logits, ref, atol=2e-2, rtol=2e-2), "mismatch vs reference"

    print("KERNEL_OK")
</pallas_src>

<mosaic_0001>
module attributes {stable_mosaic.version = 11 : i64} {
  func.func @sop_head_kernel(%arg0: memref<8x128xf32, #tpu.memory_space<vmem>>, %arg1: memref<2x128xf32, #tpu.memory_space<vmem>>, %arg2: memref<2xf32, #tpu.memory_space<smem>>, %arg3: memref<8x2xf32, #tpu.memory_space<vmem>>) attributes {dimension_semantics = [], scalar_prefetch = 0 : i64, scratch_operands = 0 : i64, tpu.core_type = #tpu.core_type<tc>} {
    %c0 = arith.constant 0 : index
    %c0_0 = arith.constant 0 : index
    %0 = vector.load %arg0[%c0, %c0_0] : memref<8x128xf32, #tpu.memory_space<vmem>>, vector<8x128xf32>
    %1 = arith.truncf %0 : vector<8x128xf32> to vector<8x128xbf16>
    %c0_1 = arith.constant 0 : index
    %c0_2 = arith.constant 0 : index
    %2 = vector.load %arg1[%c0_1, %c0_2] : memref<2x128xf32, #tpu.memory_space<vmem>>, vector<2x128xf32>
    %3 = arith.truncf %2 : vector<2x128xf32> to vector<2x128xbf16>
    %cst = arith.constant dense<0.000000e+00> : vector<8x2xf32>
    %4 = tpu.matmul %1, %3, %cst {dimension_numbers = #tpu.dot_dimension_numbers<[1], [1], [0], [0], [0, 0, 1, 0], [], []>} : vector<8x128xbf16>, vector<2x128xbf16>, vector<8x2xf32> -> vector<8x2xf32>
    %5 = tpu.iota {dimensions = array<i32: 1>} : vector<8x2xi32>
    %cst_3 = arith.constant 0.000000e+00 : f32
    %6 = vector.broadcast %cst_3 : f32 to vector<8x2xf32>
    %c0_i32 = arith.constant 0 : i32
    %7 = vector.broadcast %c0_i32 : i32 to vector<8x2xi32>
    %8 = arith.cmpi eq, %5, %7 : vector<8x2xi32>
    %c0_4 = arith.constant 0 : index
    %9 = memref.load %arg2[%c0_4] : memref<2xf32, #tpu.memory_space<smem>>
    %10 = vector.broadcast %9 : f32 to vector<8x2xf32>
    %11 = arith.select %8, %10, %6 : vector<8x2xi1>, vector<8x2xf32>
    %c1_i32 = arith.constant 1 : i32
    %12 = vector.broadcast %c1_i32 : i32 to vector<8x2xi32>
    %13 = arith.cmpi eq, %5, %12 : vector<8x2xi32>
    %c1 = arith.constant 1 : index
    %14 = memref.load %arg2[%c1] : memref<2xf32, #tpu.memory_space<smem>>
    %15 = vector.broadcast %14 : f32 to vector<8x2xf32>
    %16 = arith.select %13, %15, %11 : vector<8x2xi1>, vector<8x2xf32>
    %17 = arith.addf %4, %16 : vector<8x2xf32>
    %c0_5 = arith.constant 0 : index
    %c0_6 = arith.constant 0 : index
    %18 = vector.load %arg3[%c0_5, %c0_6] : memref<8x2xf32, #tpu.memory_space<vmem>>, vector<8x2xf32>
    tpu.vector_store %arg3[%c0_5, %c0_6], %17 {strides = array<i32>} : memref<8x2xf32, #tpu.memory_space<vmem>>, vector<8x2xf32>,
    return
  }
}

</mosaic_0001>

<llo_original>
// kernel: tpu_custom_call.1
$region0: #{tpu_custom_call.1}
  #allocation0 [shape = 'u32[]', space=smem, size = 0x4, offset = 0x4, fixed_abs, tag = 'smem constant byte address 0x4 - core index']
  #allocation1 [shape = 'u32[144,128]{1,0:T(1,128)}', space=vmem, size = 0x12000, scoped, tag = 'internal scratch']
  %s0 = inlined_call_operand.hbm [shape: f32[8,128], index: 0, kind: input, shape index: {}]
  %s1 = inlined_call_operand.vmem [shape: f32[2,128], index: 1, kind: input, shape index: {}]
  %s2 = inlined_call_operand.vmem [shape: f32[2], index: 2, kind: input, shape index: {}]
  %s3 = inlined_call_operand.vmem [shape: f32[8,2], index: 3, kind: output, shape index: {}]
  %s4 = sld [smem:[#allocation0]]
  $region30: #{tpu_custom_call.1} parent=0
    _
  %s6 = ssub.s32 1, %s4
  %s7 = scalar_select 0, %s6, %s4
  $region1: #{tpu_custom_call.1} parent=0
    #allocation2 [shape = 'u8[4096]{0}', space=vmem, size = 0x1000, scoped, tag = 'input window, operand 0, single buffered']
    #allocation3 [shape = 's32[1]{0}', space=sflag, size = 0x4, scoped, tag = 'scoped memory for tpu_custom_call.1']
    #allocation4 [shape = 's32[1]{0}', space=sflag, size = 0x4, scoped, tag = 'scoped memory for tpu_custom_call.1']
    #allocation5 [shape = 'u8[512]{0}', space=smem, size = 0x200, scoped, tag = 'input window, operand 2, single buffered']
    %8 = vsyncpa [#allocation3], 0
    %9 = vsyncpa [#allocation4], 0
    // Predicated region
    $region2: #{tpu_custom_call.1} parent=1 // pred_check
      _
    $region3: #{tpu_custom_call.1} parent=1 // pred_check_branch
      %11 = sbr.rel (0) target = $region5
    $region4: #{tpu_custom_call.1} parent=1 // pred_region
      %s13 = ssub.s32 128, 128
      %14 = vsyncadd [#allocation3], %s13
      %s16 = sshll.u32 [#allocation2], 4
      %s17 = int_to_ptr.vmem [resolvable:$true] %s16
      %19 = dma.hbm_to_vmem [thread:$0]  %s0, 128, %s17, [#allocation3]
    $region5: #{tpu_custom_call.1} parent=1 // pred_fallthru
      _
    // Predicated region
    $region6: #{tpu_custom_call.1} parent=1 // pred_check
      _
    $region7: #{tpu_custom_call.1} parent=1 // pred_check_branch
      %21 = sbr.rel (0) target = $region9
    $region8: #{tpu_custom_call.1} parent=1 // pred_region
      _
    $region9: #{tpu_custom_call.1} parent=1 // pred_fallthru
      _
    // Predicated region
    $region10: #{tpu_custom_call.1} parent=1 // pred_check
      _
    $region11: #{tpu_custom_call.1} parent=1 // pred_check_branch
      %23 = sbr.rel (0) target = $region13
    $region12: #{tpu_custom_call.1} parent=1 // pred_region
      %s25 = ssub.s32 16, 16
      %26 = vsyncadd [#allocation4], %s25
      %s28 = sshll.u32 %s2, 4
      %s29 = int_to_ptr.vmem [resolvable:$true] %s28
      %31 = dma.vmem_to_smem %s29, 16, [#allocation5], [#allocation4]
    $region13: #{tpu_custom_call.1} parent=1 // pred_fallthru
      _
    // Predicated region
    $region14: #{tpu_custom_call.1} parent=1 // pred_check
      _
    $region15: #{tpu_custom_call.1} parent=1 // pred_check_branch
      %33 = sbr.rel (0) target = $region17
    $region16: #{tpu_custom_call.1} parent=1 // pred_region
      %34 = dma.done [#allocation3], 128
    $region17: #{tpu_custom_call.1} parent=1 // pred_fallthru
      _
    // Predicated region
    $region18: #{tpu_custom_call.1} parent=1 // pred_check
      _
    $region19: #{tpu_custom_call.1} parent=1 // pred_check_branch
      %36 = sbr.rel (0) target = $region21
    $region20: #{tpu_custom_call.1} parent=1 // pred_region
      %37 = dma.done [#allocation4], 16
    $region21: #{tpu_custom_call.1} parent=1 // pred_fallthru
      _
    %38 = sfence
    %v40 = vld [vmem:[#allocation2] sm:$0xff]
    %v41 = vpack.c.bf16 %v40, %v40
    %v42 = vld [vmem:[%s1] sm:$0x3]
    %v43 = vpack.c.bf16 %v42, %v42
    %v44 = vlaneseq
    %v45 = vand.u32 %v44, 127
    %vm46 = vcmp.eq.s32.totalorder %v45, 0
    %s47 = sld [smem:[#allocation5]]
    %v48 = vstv %s47
    %v49 = vsel %vm46, %v48, 0.0
    %vm50 = vcmp.eq.s32.totalorder %v45, 1
    %s51 = sld [smem:[#allocation5 + $0x1]]
    %v52 = vstv %s51
    %v53 = vsel %vm50, %v52, %v49
    %54 = vmatprep.subr.bf16.mxu0 0
    %55 = vmatpush1.bf16.xpose.msra.mxu0 %v43
    %56 = vmatprep.subr.bf16.mxu0 0
    %57 = vmatpush1.bf16.xpose.msra.mxu0 0
    %58 = vmatprep.subr.bf16.mxu0 0
    %59 = vmatpush1.bf16.xpose.msra.mxu0 0
    %60 = vmatprep.subr.bf16.mxu0 0
    %61 = vmatpush1.bf16.xpose.msra.mxu0 0
    %62 = vmatprep.subr.bf16.mxu0 0
    %63 = vmatpush1.bf16.xpose.msra.mxu0 0
    %64 = vmatprep.subr.bf16.mxu0 0
    %65 = vmatpush1.bf16.xpose.msra.mxu0 0
    %66 = vmatprep.subr.bf16.mxu0 0
    %67 = vmatpush1.bf16.xpose.msra.mxu0 0
    %68 = vmatprep.subr.bf16.mxu0 0
    %69 = vmatpush1.bf16.xpose.msra.mxu0 0
    %70 = vmatprep.subr.bf16.mxu0 0
    %71 = vmatpush1.bf16.xpose.msra.mxu0 0
    %72 = vmatprep.subr.bf16.mxu0 0
    %73 = vmatpush1.bf16.xpose.msra.mxu0 0
    %74 = vmatprep.subr.bf16.mxu0 0
    %75 = vmatpush1.bf16.xpose.msra.mxu0 0
    %76 = vmatprep.subr.bf16.mxu0 0
    %77 = vmatpush1.bf16.xpose.msra.mxu0 0
    %78 = vmatprep.subr.bf16.mxu0 0
    %79 = vmatpush1.bf16.xpose.msra.mxu0 0
    %80 = vmatprep.subr.bf16.mxu0 0
    %81 = vmatpush1.bf16.xpose.msra.mxu0 0
    %82 = vmatprep.subr.bf16.mxu0 0
    %83 = vmatpush1.bf16.xpose.msra.mxu0 0
    %84 = vmatprep.subr.bf16.mxu0 0
    %85 = vmatpush1.bf16.xpose.msra.mxu0 0
    %86 = vmatprep.mubr.bf16.mxu0 0
    %87 = vmatmul.mubr.bf16.gmra.mrb[0].mxu0 %v41
    %v88 = vpop.f32.mrb[0].mxu0
    %v89 = vadd.f32 %v53, %v88
    %v90 = vpop.f32.mrb[0].mxu0
    %v91 = vpop.f32.mrb[0].mxu0
    %v92 = vpop.f32.mrb[0].mxu0
    %93 = vdwg.mxu0
    %vm94 = vcmask 15360
    %95 = vst.msk [vmem:[%s3] sm:$0xff] %vm94, %v89
    // Predicated region
    $region22: #{tpu_custom_call.1} parent=1 // pred_check
      _
    $region23: #{tpu_custom_call.1} parent=1 // pred_check_branch
      %97 = sbr.rel (0) target = $region25
    $region24: #{tpu_custom_call.1} parent=1 // pred_region
      _
    $region25: #{tpu_custom_call.1} parent=1 // pred_fallthru
      _
    // Predicated region
    $region26: #{tpu_custom_call.1} parent=1 // pred_check
      _
    $region27: #{tpu_custom_call.1} parent=1 // pred_check_branch
      %99 = sbr.rel (0) target = $region29
    $region28: #{tpu_custom_call.1} parent=1 // pred_region
      _
    $region29: #{tpu_custom_call.1} parent=1 // pred_fallthru
      _
    %100 = vsyncpa [#allocation3], 1
    %101 = vsyncpa [#allocation4], 1

</llo_original>
